<compile_context>
chip_gen: v7x
topology: tpu7x:2x2x1
jax: 0.10.0
libtpu: 0.0.40
codegen_flags: <defaults>
</compile_context>

<pallas_src>
import jax
import jax.numpy as jnp
from jax.experimental import pallas as pl
from jax.experimental.pallas import tpu as pltpu

NEG_SLOPE = 0.01  # nn.LeakyReLU default


def _leaky_relu(x):
    # mul + max (2 VALU ops) instead of cmp + mul + select; valid for 0 < slope < 1.
    return jnp.maximum(x, NEG_SLOPE * x)


def _round_up(n, m):
    return ((n + m - 1) // m) * m


def windpower_kernel(xt_ref, w1_ref, b1_ref, w2_ref, b2_ref, w3_ref, b3_ref, o_ref):
    # xt_ref : (D_in, TB)  one lane-dense batch tile
    # w*_ref : PyTorch (out, in) layout, VMEM-resident across the grid
    # b*_ref : (out, 1) sublane-broadcast bias (f32)
    # o_ref  : (1, TB) lane-dense output slab
    xt = xt_ref[...]

    # fc1 + LeakyReLU (f32 accumulation; bias/activation in f32)
    h1 = jnp.dot(w1_ref[...], xt, preferred_element_type=jnp.float32)
    h1 = _leaky_relu(h1 + b1_ref[...])                            # (H1, TB)

    # Dropout: identity at inference time.
    # TODO(synk): training-mode dropout (pltpu.prng_random_bits mask) not implemented.

    # fc2 + LeakyReLU
    h2 = jnp.dot(w2_ref[...], h1.astype(w2_ref.dtype),
                 preferred_element_type=jnp.float32)
    h2 = _leaky_relu(h2 + b2_ref[...])                            # (H2, TB)

    # fc3 (single output unit) -> lane-dense (1, TB) result, unmasked store
    out = jnp.dot(w3_ref[...], h2.astype(w3_ref.dtype),
                  preferred_element_type=jnp.float32)
    o_ref[...] = (out + b3_ref[...]).astype(o_ref.dtype)


def windpower_forward(x, params, *, block_b=2048, compute_dtype=jnp.float32):
    """Inference forward pass of WindPowerNN.

    x      : (B, input_size) float32
    params : (w1, b1, w2, b2, w3, b3); w_i in PyTorch (out, in) layout,
             b_i as (out, 1) column vectors (float32).
    Returns: (B, 1) float32
    """
    w1, b1, w2, b2, w3, b3 = params
    B, d_in = x.shape

    # Batch tile on the lane axis: multiple of 128, capped by the padded batch.
    tb = min(_round_up(block_b, 128), _round_up(B, 128))
    b_pad = _round_up(B, tb)
    n_tiles = b_pad // tb

    # Pad batch to a tile multiple and transpose so batch occupies the lane axis.
    xt = jnp.zeros((d_in, b_pad), compute_dtype).at[:, :B].set(
        x.T.astype(compute_dtype))

    w1c = w1.astype(compute_dtype)
    w2c = w2.astype(compute_dtype)
    w3c = w3.astype(compute_dtype)

    # Full-array spec with constant block index -> stays resident in VMEM.
    resident = lambda a: pl.BlockSpec(a.shape, lambda i: (0, 0))

    out = pl.pallas_call(
        windpower_kernel,
        out_shape=jax.ShapeDtypeStruct((1, b_pad), jnp.float32),
        grid=(n_tiles,),
        in_specs=[
            pl.BlockSpec((d_in, tb), lambda i: (0, i)),   # x tile, double-buffered
            resident(w1c), resident(b1),
            resident(w2c), resident(b2),
            resident(w3c), resident(b3),
        ],
        out_specs=pl.BlockSpec((1, tb), lambda i: (0, i)),
        compiler_params=pltpu.CompilerParams(
            dimension_semantics=("parallel",),            # 2 TCs on v7x
            vmem_limit_bytes=32 * 1024 * 1024,            # explicit; safe on 64 MiB v7x
        ),
    )(xt, w1c, b1, w2c, b2, w3c, b3)

    return out[0, :B].reshape(B, 1)


def init_params(key, input_size, hidden_size_1, hidden_size_2):
    """Deterministic parameter init (uniform, PyTorch-Linear-like fan-in bound).

    Weights are kept in PyTorch's (out_features, in_features) layout; biases as
    (out_features, 1) columns for sublane broadcast inside the kernel.
    """
    ks = jax.random.split(key, 6)

    def lin(kw, kb, fan_in, fan_out):
        bound = 1.0 / jnp.sqrt(jnp.float32(fan_in))
        w = jax.random.uniform(kw, (fan_out, fan_in), jnp.float32, -bound, bound)
        b = jax.random.uniform(kb, (fan_out, 1), jnp.float32, -bound, bound)
        return w, b

    w1, b1 = lin(ks[0], ks[1], input_size, hidden_size_1)
    w2, b2 = lin(ks[2], ks[3], hidden_size_1, hidden_size_2)
    w3, b3 = lin(ks[4], ks[5], hidden_size_2, 1)
    return (w1, b1, w2, b2, w3, b3)


def reference_forward(x, params):
    w1, b1, w2, b2, w3, b3 = params
    h1 = _leaky_relu(x @ w1.T + b1.T)
    h2 = _leaky_relu(h1 @ w2.T + b2.T)
    return h2 @ w3.T + b3.T


if __name__ == "__main__":
    key = jax.random.PRNGKey(0)
    k_x, k_x2, k_p = jax.random.split(key, 3)

    input_size, hidden_size_1, hidden_size_2 = 8, 32, 16
    params = init_params(k_p, input_size, hidden_size_1, hidden_size_2)

    # Small batch (single tile, padded to 128 lanes).
    batch = 8
    x = jax.random.normal(k_x, (batch, input_size), dtype=jnp.float32)
    out = jax.block_until_ready(windpower_forward(x, params))
    ref = reference_forward(x, params)
    assert out.shape == (batch, 1), out.shape
    assert jnp.allclose(out, ref, atol=1e-4, rtol=1e-4), (out, ref)

    # Ragged batch exercising multiple grid tiles + padding.
    batch2 = 300
    x2 = jax.random.normal(k_x2, (batch2, input_size), dtype=jnp.float32)
    out2 = jax.block_until_ready(windpower_forward(x2, params, block_b=128))
    ref2 = reference_forward(x2, params)
    assert out2.shape == (batch2, 1), out2.shape
    assert jnp.allclose(out2, ref2, atol=1e-4, rtol=1e-4)

    # bf16 HBM path (halves dominant input traffic on v6e/v7x), f32 accumulation.
    out_bf16 = jax.block_until_ready(
        windpower_forward(x2, params, block_b=128, compute_dtype=jnp.bfloat16))
    assert out_bf16.shape == (batch2, 1)
    assert bool(jnp.all(jnp.isfinite(out_bf16)))
    assert float(jnp.max(jnp.abs(out_bf16 - ref2))) < 0.1 * (1.0 + float(jnp.max(jnp.abs(ref2))))

    print("KERNEL_OK")
</pallas_src>

<mosaic_0001>
module attributes {stable_mosaic.version = 11 : i64} {
  func.func @windpower_kernel(%arg0: i32, %arg1: memref<8x128xf32, #tpu.memory_space<vmem>>, %arg2: memref<32x8xf32, #tpu.memory_space<vmem>>, %arg3: memref<32x1xf32, #tpu.memory_space<vmem>>, %arg4: memref<16x32xf32, #tpu.memory_space<vmem>>, %arg5: memref<16x1xf32, #tpu.memory_space<vmem>>, %arg6: memref<1x16xf32, #tpu.memory_space<vmem>>, %arg7: memref<1x1xf32, #tpu.memory_space<vmem>>, %arg8: memref<1x128xf32, #tpu.memory_space<vmem>>) attributes {dimension_semantics = [#tpu.dimension_semantics<parallel>], iteration_bounds = array<i64: 1>, scalar_prefetch = 0 : i64, scratch_operands = 0 : i64, tpu.core_type = #tpu.core_type<tc>, window_params = [{transform_indices = @transform_0, window_bounds = array<i64: 8, 128>}, {pipeline_mode = #tpu.pipeline_mode<synchronous>, transform_indices = @transform_1, window_bounds = array<i64: 32, 8>}, {pipeline_mode = #tpu.pipeline_mode<synchronous>, transform_indices = @transform_2, window_bounds = array<i64: 32, 1>}, {pipeline_mode = #tpu.pipeline_mode<synchronous>, transform_indices = @transform_3, window_bounds = array<i64: 16, 32>}, {pipeline_mode = #tpu.pipeline_mode<synchronous>, transform_indices = @transform_4, window_bounds = array<i64: 16, 1>}, {pipeline_mode = #tpu.pipeline_mode<synchronous>, transform_indices = @transform_5, window_bounds = array<i64: 1, 16>}, {pipeline_mode = #tpu.pipeline_mode<synchronous>, transform_indices = @transform_6, window_bounds = array<i64: 1, 1>}, {transform_indices = @transform_7, window_bounds = array<i64: 1, 128>}]} {
    %c0 = arith.constant 0 : index
    %c0_0 = arith.constant 0 : index
    %0 = vector.load %arg1[%c0, %c0_0] : memref<8x128xf32, #tpu.memory_space<vmem>>, vector<8x128xf32>
    %c0_1 = arith.constant 0 : index
    %c0_2 = arith.constant 0 : index
    %1 = vector.load %arg2[%c0_1, %c0_2] : memref<32x8xf32, #tpu.memory_space<vmem>>, vector<32x8xf32>
    %cst = arith.constant dense<0.000000e+00> : vector<32x128xf32>
    %2 = tpu.matmul %1, %0, %cst {dimension_numbers = #tpu.dot_dimension_numbers<[1], [0], [0], [1], [0, 0, 1, 1], [], []>} : vector<32x8xf32>, vector<8x128xf32>, vector<32x128xf32> -> vector<32x128xf32>
    %c0_3 = arith.constant 0 : index
    %c0_4 = arith.constant 0 : index
    %3 = vector.load %arg3[%c0_3, %c0_4] : memref<32x1xf32, #tpu.memory_space<vmem>>, vector<32x1xf32>
    %4 = vector.broadcast %3 : vector<32x1xf32> to vector<32x128xf32>
    %5 = arith.addf %2, %4 : vector<32x128xf32>
    %cst_5 = arith.constant 0.00999999977 : f32
    %6 = vector.broadcast %cst_5 : f32 to vector<32x128xf32>
    %7 = arith.mulf %6, %5 : vector<32x128xf32>
    %8 = arith.maximumf %5, %7 : vector<32x128xf32>
    %c0_6 = arith.constant 0 : index
    %c0_7 = arith.constant 0 : index
    %9 = vector.load %arg4[%c0_6, %c0_7] : memref<16x32xf32, #tpu.memory_space<vmem>>, vector<16x32xf32>
    %cst_8 = arith.constant dense<0.000000e+00> : vector<16x128xf32>
    %10 = tpu.matmul %9, %8, %cst_8 {dimension_numbers = #tpu.dot_dimension_numbers<[1], [0], [0], [1], [0, 0, 1, 1], [], []>} : vector<16x32xf32>, vector<32x128xf32>, vector<16x128xf32> -> vector<16x128xf32>
    %c0_9 = arith.constant 0 : index
    %c0_10 = arith.constant 0 : index
    %11 = vector.load %arg5[%c0_9, %c0_10] : memref<16x1xf32, #tpu.memory_space<vmem>>, vector<16x1xf32>
    %12 = vector.broadcast %11 : vector<16x1xf32> to vector<16x128xf32>
    %13 = arith.addf %10, %12 : vector<16x128xf32>
    %cst_11 = arith.constant 0.00999999977 : f32
    %14 = vector.broadcast %cst_11 : f32 to vector<16x128xf32>
    %15 = arith.mulf %14, %13 : vector<16x128xf32>
    %16 = arith.maximumf %13, %15 : vector<16x128xf32>
    %c0_12 = arith.constant 0 : index
    %c0_13 = arith.constant 0 : index
    %17 = vector.load %arg6[%c0_12, %c0_13] : memref<1x16xf32, #tpu.memory_space<vmem>>, vector<1x16xf32>
    %cst_14 = arith.constant dense<0.000000e+00> : vector<1x128xf32>
    %18 = tpu.matmul %17, %16, %cst_14 {dimension_numbers = #tpu.dot_dimension_numbers<[1], [0], [0], [1], [0, 0, 1, 1], [], []>} : vector<1x16xf32>, vector<16x128xf32>, vector<1x128xf32> -> vector<1x128xf32>
    %c0_15 = arith.constant 0 : index
    %c0_16 = arith.constant 0 : index
    %19 = vector.load %arg7[%c0_15, %c0_16] : memref<1x1xf32, #tpu.memory_space<vmem>>, vector<1x1xf32>
    %20 = vector.broadcast %19 : vector<1x1xf32> to vector<1x128xf32>
    %21 = arith.addf %18, %20 : vector<1x128xf32>
    %c0_17 = arith.constant 0 : index
    %c0_18 = arith.constant 0 : index
    %22 = vector.load %arg8[%c0_17, %c0_18] : memref<1x128xf32, #tpu.memory_space<vmem>>, vector<1x128xf32>
    tpu.vector_store %arg8[%c0_17, %c0_18], %21 {strides = array<i32>} : memref<1x128xf32, #tpu.memory_space<vmem>>, vector<1x128xf32>,
    return
  }
  func.func @transform_0(%arg0: i32) -> (i32, i32) {
    %c0_i32 = arith.constant 0 : i32
    %c0_i32_0 = arith.constant 0 : i32
    return %c0_i32, %arg0 : i32, i32
  }
  func.func @transform_1(%arg0: i32) -> (i32, i32) {
    %c0_i32 = arith.constant 0 : i32
    %c0_i32_0 = arith.constant 0 : i32
    %c0_i32_1 = arith.constant 0 : i32
    return %c0_i32, %c0_i32_0 : i32, i32
  }
  func.func @transform_2(%arg0: i32) -> (i32, i32) {
    %c0_i32 = arith.constant 0 : i32
    %c0_i32_0 = arith.constant 0 : i32
    %c0_i32_1 = arith.constant 0 : i32
    return %c0_i32, %c0_i32_0 : i32, i32
  }
  func.func @transform_3(%arg0: i32) -> (i32, i32) {
    %c0_i32 = arith.constant 0 : i32
    %c0_i32_0 = arith.constant 0 : i32
    %c0_i32_1 = arith.constant 0 : i32
    return %c0_i32, %c0_i32_0 : i32, i32
  }
  func.func @transform_4(%arg0: i32) -> (i32, i32) {
    %c0_i32 = arith.constant 0 : i32
    %c0_i32_0 = arith.constant 0 : i32
    %c0_i32_1 = arith.constant 0 : i32
    return %c0_i32, %c0_i32_0 : i32, i32
  }
  func.func @transform_5(%arg0: i32) -> (i32, i32) {
    %c0_i32 = arith.constant 0 : i32
    %c0_i32_0 = arith.constant 0 : i32
    %c0_i32_1 = arith.constant 0 : i32
    return %c0_i32, %c0_i32_0 : i32, i32
  }
  func.func @transform_6(%arg0: i32) -> (i32, i32) {
    %c0_i32 = arith.constant 0 : i32
    %c0_i32_0 = arith.constant 0 : i32
    %c0_i32_1 = arith.constant 0 : i32
    return %c0_i32, %c0_i32_0 : i32, i32
  }
  func.func @transform_7(%arg0: i32) -> (i32, i32) {
    %c0_i32 = arith.constant 0 : i32
    %c0_i32_0 = arith.constant 0 : i32
    return %c0_i32, %arg0 : i32, i32
  }
}

</mosaic_0001>

<llo_original>
// kernel: tpu_custom_call.1
$region0: #{tpu_custom_call.1}
  #allocation0 [shape = 'u32[]', space=smem, size = 0x4, offset = 0x4, fixed_abs, tag = 'smem constant byte address 0x4 - core index']
  #allocation1 [shape = 'u32[144,128]{1,0:T(1,128)}', space=vmem, size = 0x12000, scoped, tag = 'internal scratch']
  #allocation2 [shape = 'f32[1,1]{1,0:T(1,128)S(1)}', space=vmem, size = 0x200, scoped, tag = 'scoped memory for tpu_custom_call.1']
  %s0 = inlined_call_operand.vmem [shape: f32[8,128], index: 0, kind: input, shape index: {}]
  %s1 = inlined_call_operand.vmem [shape: f32[32,8], index: 1, kind: input, shape index: {}]
  %s2 = inlined_call_operand.vmem [shape: f32[32,1], index: 2, kind: input, shape index: {}]
  %s3 = inlined_call_operand.vmem [shape: f32[16,32], index: 3, kind: input, shape index: {}]
  %s4 = inlined_call_operand.vmem [shape: f32[16,1], index: 4, kind: input, shape index: {}]
  %s5 = inlined_call_operand.vmem [shape: f32[1,16], index: 5, kind: input, shape index: {}]
  %s6 = inlined_call_operand.<no memory space> [shape: f32[1,1], index: 6, kind: input, shape index: {}]
  %s7 = inlined_call_operand.hbm [shape: f32[1,128], index: 7, kind: output, shape index: {}]
  %s8 = sld [smem:[#allocation0]]
  $region38: #{tpu_custom_call.1} parent=0
    _
  %s10 = ssub.s32 1, %s8
  %s11 = scalar_select 0, %s10, %s8
  %v12 = vstv %s6
  %13 = vst [vmem:[#allocation2] sm:$0x1] %v12
  $region1: #{tpu_custom_call.1} parent=0
    #allocation3 [shape = 'u8[512]{0}', space=vmem, size = 0x400, scoped, tag = 'output window, operand 0, single buffered']
    #allocation4 [shape = 's32[1]{0}', space=sflag, size = 0x4, scoped, tag = 'scoped memory for tpu_custom_call.1']
    %14 = vsyncpa [#allocation4], 0
    // Predicated region
    $region2: #{tpu_custom_call.1} parent=1 // pred_check
      _
    $region3: #{tpu_custom_call.1} parent=1 // pred_check_branch
      %16 = sbr.rel (0) target = $region5
    $region4: #{tpu_custom_call.1} parent=1 // pred_region
      _
    $region5: #{tpu_custom_call.1} parent=1 // pred_fallthru
      _
    // Predicated region
    $region6: #{tpu_custom_call.1} parent=1 // pred_check
      _
    $region7: #{tpu_custom_call.1} parent=1 // pred_check_branch
      %18 = sbr.rel (0) target = $region9
    $region8: #{tpu_custom_call.1} parent=1 // pred_region
      _
    $region9: #{tpu_custom_call.1} parent=1 // pred_fallthru
      _
    // Predicated region
    $region10: #{tpu_custom_call.1} parent=1 // pred_check
      _
    $region11: #{tpu_custom_call.1} parent=1 // pred_check_branch
      %20 = sbr.rel (0) target = $region13
    $region12: #{tpu_custom_call.1} parent=1 // pred_region
      _
    $region13: #{tpu_custom_call.1} parent=1 // pred_fallthru
      _
    // Predicated region
    $region14: #{tpu_custom_call.1} parent=1 // pred_check
      _
    $region15: #{tpu_custom_call.1} parent=1 // pred_check_branch
      %22 = sbr.rel (0) target = $region17
    $region16: #{tpu_custom_call.1} parent=1 // pred_region
      _
    $region17: #{tpu_custom_call.1} parent=1 // pred_fallthru
      _
    // Predicated region
    $region18: #{tpu_custom_call.1} parent=1 // pred_check
      _
    $region19: #{tpu_custom_call.1} parent=1 // pred_check_branch
      %24 = sbr.rel (0) target = $region21
    $region20: #{tpu_custom_call.1} parent=1 // pred_region
      _
    $region21: #{tpu_custom_call.1} parent=1 // pred_fallthru
      _
    // Predicated region
    $region22: #{tpu_custom_call.1} parent=1 // pred_check
      _
    $region23: #{tpu_custom_call.1} parent=1 // pred_check_branch
      %26 = sbr.rel (0) target = $region25
    $region24: #{tpu_custom_call.1} parent=1 // pred_region
      _
    $region25: #{tpu_custom_call.1} parent=1 // pred_fallthru
      _
    // Predicated region
    $region26: #{tpu_custom_call.1} parent=1 // pred_check
      _
    $region27: #{tpu_custom_call.1} parent=1 // pred_check_branch
      %28 = sbr.rel (0) target = $region29
    $region28: #{tpu_custom_call.1} parent=1 // pred_region
      _
    $region29: #{tpu_custom_call.1} parent=1 // pred_fallthru
      _
    %v29 = vld [vmem:[%s0] sm:$0xff]
    %v30 = vld [vmem:[%s1] sm:$0xff]
    %v31 = vld [vmem:[%s1 + $0x8] sm:$0xff]
    %v32 = vld [vmem:[%s1 + $0x10] sm:$0xff]
    %v33 = vld [vmem:[%s1 + $0x18] sm:$0xff]
    %v34 = vld [vmem:[%s2] sm:$0xff]
    %v35 = vld [vmem:[%s2 + $0x8] sm:$0xff]
    %v36 = vld [vmem:[%s2 + $0x10] sm:$0xff]
    %v37 = vld [vmem:[%s2 + $0x18] sm:$0xff]
    %39 = vset.pattern.permute.xlu0 0
    %40 = vperm.xlu0 %39, %v34
    %v41 = vpop.permute.xlu0 %40
    %44 = vset.pattern.permute.xlu0 0
    %45 = vperm.xlu0 %44, %v35
    %v46 = vpop.permute.xlu0 %45
    %49 = vset.pattern.permute.xlu0 0
    %50 = vperm.xlu0 %49, %v36
    %v51 = vpop.permute.xlu0 %50
    %54 = vset.pattern.permute.xlu0 0
    %55 = vperm.xlu0 %54, %v37
    %v56 = vpop.permute.xlu0 %55
    %vm58 = vcmask 64512
    %v60 = vsel %vm58, %v30, 0
    %v63 = vsel %vm58, %v31, 0
    %v66 = vsel %vm58, %v32, 0
    %v69 = vsel %vm58, %v33, 0
    %71 = vmatprep.subr.mxu0 0.0
    %72 = vmatpush1.msra.mxu0 %v29
    %73 = vmatprep.subr.mxu0 0.0
    %74 = vmatpush1.msra.mxu0 0.0
    %75 = vmatprep.subr.mxu0 0.0
    %76 = vmatpush1.msra.mxu0 0.0
    %77 = vmatprep.subr.mxu0 0.0
    %78 = vmatpush1.msra.mxu0 0.0
    %79 = vmatprep.subr.mxu0 0.0
    %80 = vmatpush1.msra.mxu0 0.0
    %81 = vmatprep.subr.mxu0 0.0
    %82 = vmatpush1.msra.mxu0 0.0
    %83 = vmatprep.subr.mxu0 0.0
    %84 = vmatpush1.msra.mxu0 0.0
    %85 = vmatprep.subr.mxu0 0.0
    %86 = vmatpush1.msra.mxu0 0.0
    %87 = vmatprep.subr.mxu0 0.0
    %88 = vmatpush1.msra.mxu0 0.0
    %89 = vmatprep.subr.mxu0 0.0
    %90 = vmatpush1.msra.mxu0 0.0
    %91 = vmatprep.subr.mxu0 0.0
    %92 = vmatpush1.msra.mxu0 0.0
    %93 = vmatprep.subr.mxu0 0.0
    %94 = vmatpush1.msra.mxu0 0.0
    %95 = vmatprep.subr.mxu0 0.0
    %96 = vmatpush1.msra.mxu0 0.0
    %97 = vmatprep.subr.mxu0 0.0
    %98 = vmatpush1.msra.mxu0 0.0
    %99 = vmatprep.subr.mxu0 0.0
    %100 = vmatpush1.msra.mxu0 0.0
    %101 = vmatprep.subr.mxu0 0.0
    %102 = vmatpush1.msra.mxu0 0.0
    %103 = vmatprep.subr.mxu0 0.0
    %104 = vmatpush1.msra.mxu0 0.0
    %105 = vmatprep.subr.mxu0 0.0
    %106 = vmatpush1.msra.mxu0 0.0
    %107 = vmatprep.subr.mxu0 0.0
    %108 = vmatpush1.msra.mxu0 0.0
    %109 = vmatprep.subr.mxu0 0.0
    %110 = vmatpush1.msra.mxu0 0.0
    %111 = vmatprep.subr.mxu0 0.0
    %112 = vmatpush1.msra.mxu0 0.0
    %113 = vmatprep.subr.mxu0 0.0
    %114 = vmatpush1.msra.mxu0 0.0
    %115 = vmatprep.subr.mxu0 0.0
    %116 = vmatpush1.msra.mxu0 0.0
    %117 = vmatprep.subr.mxu0 0.0
    %118 = vmatpush1.msra.mxu0 0.0
    %119 = vmatprep.subr.mxu0 0.0
    %120 = vmatpush1.msra.mxu0 0.0
    %121 = vmatprep.subr.mxu0 0.0
    %122 = vmatpush1.msra.mxu0 0.0
    %123 = vmatprep.subr.mxu0 0.0
    %124 = vmatpush1.msra.mxu0 0.0
    %125 = vmatprep.subr.mxu0 0.0
    %126 = vmatpush1.msra.mxu0 0.0
    %127 = vmatprep.subr.mxu0 0.0
    %128 = vmatpush1.msra.mxu0 0.0
    %129 = vmatprep.subr.mxu0 0.0
    %130 = vmatpush1.msra.mxu0 0.0
    %131 = vmatprep.subr.mxu0 0.0
    %132 = vmatpush1.msra.mxu0 0.0
    %133 = vmatprep.subr.mxu0 0.0
    %134 = vmatpush1.msra.mxu0 0.0
    %135 = vmatprep.mubr.f32.mxu0 0.0
    %136 = vmatmul.mubr.f32.gmra.mrb[0].mxu0 %v60
    %v137 = vpop.f32.mrb[0].mxu0
    %v138 = vadd.f32 %v41, %v137
    %v139 = vpop.f32.mrb[0].mxu0
    %140 = vmatprep.mubr.f32.mxu0 0.0
    %141 = vmatmul.mubr.f32.gmra.mrb[0].mxu0 %v63
    %v142 = vpop.f32.mrb[0].mxu0
    %v143 = vadd.f32 %v46, %v142
    %v144 = vpop.f32.mrb[0].mxu0
    %145 = vmatprep.mubr.f32.mxu0 0.0
    %146 = vmatmul.mubr.f32.gmra.mrb[0].mxu0 %v66
    %v147 = vpop.f32.mrb[0].mxu0
    %v148 = vadd.f32 %v51, %v147
    %v149 = vpop.f32.mrb[0].mxu0
    %150 = vmatprep.mubr.f32.mxu0 0.0
    %151 = vmatmul.mubr.f32.gmra.mrb[0].mxu0 %v69
    %v152 = vpop.f32.mrb[0].mxu0
    %v153 = vadd.f32 %v56, %v152
    %v154 = vpop.f32.mrb[0].mxu0
    %155 = vdwg.mxu0
    %v156 = vmul.f32 %v138, 0.01
    %v157 = vmul.f32 %v143, 0.01
    %v158 = vmul.f32 %v148, 0.01
    %v159 = vmul.f32 %v153, 0.01
    %v160 = vmax.f32 %v138, %v156
    %v161 = vmax.f32 %v143, %v157
    %v162 = vmax.f32 %v148, %v158
    %v163 = vmax.f32 %v153, %v159
    %v164 = vld [vmem:[%s3] sm:$0xff]
    %v165 = vld [vmem:[%s3 + $0x8] sm:$0xff]
    %v166 = vld [vmem:[%s4] sm:$0xff]
    %v167 = vld [vmem:[%s4 + $0x8] sm:$0xff]
    %169 = vset.pattern.permute.xlu0 0
    %170 = vperm.xlu0 %169, %v166
    %v171 = vpop.permute.xlu0 %170
    %174 = vset.pattern.permute.xlu0 0
    %175 = vperm.xlu0 %174, %v167
    %v176 = vpop.permute.xlu0 %175
    %vm178 = vcmask 261120
    %v180 = vsel %vm178, %v164, 0
    %v183 = vsel %vm178, %v165, 0
    %185 = vmatprep.subr.mxu0 0.0
    %186 = vmatpush1.msra.mxu0 %v160
    %187 = vmatprep.subr.mxu0 0.0
    %188 = vmatpush1.msra.mxu0 %v161
    %189 = vmatprep.subr.mxu0 0.0
    %190 = vmatpush1.msra.mxu0 %v162
    %191 = vmatprep.subr.mxu0 0.0
    %192 = vmatpush1.msra.mxu0 %v163
    %193 = vmatprep.subr.mxu0 0.0
    %194 = vmatpush1.msra.mxu0 0.0
    %195 = vmatprep.subr.mxu0 0.0
    %196 = vmatpush1.msra.mxu0 0.0
    %197 = vmatprep.subr.mxu0 0.0
    %198 = vmatpush1.msra.mxu0 0.0
    %199 = vmatprep.subr.mxu0 0.0
    %200 = vmatpush1.msra.mxu0 0.0
    %201 = vmatprep.subr.mxu0 0.0
    %202 = vmatpush1.msra.mxu0 0.0
    %203 = vmatprep.subr.mxu0 0.0
    %204 = vmatpush1.msra.mxu0 0.0
    %205 = vmatprep.subr.mxu0 0.0
    %206 = vmatpush1.msra.mxu0 0.0
    %207 = vmatprep.subr.mxu0 0.0
    %208 = vmatpush1.msra.mxu0 0.0
    %209 = vmatprep.subr.mxu0 0.0
    %210 = vmatpush1.msra.mxu0 0.0
    %211 = vmatprep.subr.mxu0 0.0
    %212 = vmatpush1.msra.mxu0 0.0
    %213 = vmatprep.subr.mxu0 0.0
    %214 = vmatpush1.msra.mxu0 0.0
    %215 = vmatprep.subr.mxu0 0.0
    %216 = vmatpush1.msra.mxu0 0.0
    %217 = vmatprep.subr.mxu0 0.0
    %218 = vmatpush1.msra.mxu0 0.0
    %219 = vmatprep.subr.mxu0 0.0
    %220 = vmatpush1.msra.mxu0 0.0
    %221 = vmatprep.subr.mxu0 0.0
    %222 = vmatpush1.msra.mxu0 0.0
    %223 = vmatprep.subr.mxu0 0.0
    %224 = vmatpush1.msra.mxu0 0.0
    %225 = vmatprep.subr.mxu0 0.0
    %226 = vmatpush1.msra.mxu0 0.0
    %227 = vmatprep.subr.mxu0 0.0
    %228 = vmatpush1.msra.mxu0 0.0
    %229 = vmatprep.subr.mxu0 0.0
    %230 = vmatpush1.msra.mxu0 0.0
    %231 = vmatprep.subr.mxu0 0.0
    %232 = vmatpush1.msra.mxu0 0.0
    %233 = vmatprep.subr.mxu0 0.0
    %234 = vmatpush1.msra.mxu0 0.0
    %235 = vmatprep.subr.mxu0 0.0
    %236 = vmatpush1.msra.mxu0 0.0
    %237 = vmatprep.subr.mxu0 0.0
    %238 = vmatpush1.msra.mxu0 0.0
    %239 = vmatprep.subr.mxu0 0.0
    %240 = vmatpush1.msra.mxu0 0.0
    %241 = vmatprep.subr.mxu0 0.0
    %242 = vmatpush1.msra.mxu0 0.0
    %243 = vmatprep.subr.mxu0 0.0
    %244 = vmatpush1.msra.mxu0 0.0
    %245 = vmatprep.subr.mxu0 0.0
    %246 = vmatpush1.msra.mxu0 0.0
    %247 = vmatprep.subr.mxu0 0.0
    %248 = vmatpush1.msra.mxu0 0.0
    %249 = vmatprep.mubr.f32.mxu0 0.0
    %250 = vmatmul.mubr.f32.gmra.mrb[0].mxu0 %v180
    %v251 = vpop.f32.mrb[0].mxu0
    %v252 = vadd.f32 %v171, %v251
    %v253 = vpop.f32.mrb[0].mxu0
    %254 = vmatprep.mubr.f32.mxu0 0.0
    %255 = vmatmul.mubr.f32.gmra.mrb[0].mxu0 %v183
    %v256 = vpop.f32.mrb[0].mxu0
    %v257 = vadd.f32 %v176, %v256
    %v258 = vpop.f32.mrb[0].mxu0
    %259 = vdwg.mxu0
    %v260 = vmul.f32 %v252, 0.01
    %v261 = vmul.f32 %v257, 0.01
    %v262 = vmax.f32 %v252, %v260
    %v263 = vmax.f32 %v257, %v261
    %v264 = vld [vmem:[%s5] sm:$0x1]
    %v265 = vld [vmem:[#allocation2] sm:$0x1]
    %267 = vset.pattern.permute.xlu0 0
    %268 = vperm.xlu0 %267, %v265
    %v269 = vpop.permute.xlu0 %268
    %v271 = vlaneseq
    %v272 = vshrl.u32 %v271, 7
    %v273 = vsub.s32 0, %v272
    %v274 = vrot.slane %v269, %v273
    %vm275 = vcmask 130048
    %v277 = vsel %vm275, %v264, 0
    %279 = vmatprep.subr.mxu0 0.0
    %280 = vmatpush1.msra.mxu0 %v262
    %281 = vmatprep.subr.mxu0 0.0
    %282 = vmatpush1.msra.mxu0 %v263
    %283 = vmatprep.subr.mxu0 0.0
    %284 = vmatpush1.msra.mxu0 0.0
    %285 = vmatprep.subr.mxu0 0.0
    %286 = vmatpush1.msra.mxu0 0.0
    %287 = vmatprep.subr.mxu0 0.0
    %288 = vmatpush1.msra.mxu0 0.0
    %289 = vmatprep.subr.mxu0 0.0
    %290 = vmatpush1.msra.mxu0 0.0
    %291 = vmatprep.subr.mxu0 0.0
    %292 = vmatpush1.msra.mxu0 0.0
    %293 = vmatprep.subr.mxu0 0.0
    %294 = vmatpush1.msra.mxu0 0.0
    %295 = vmatprep.subr.mxu0 0.0
    %296 = vmatpush1.msra.mxu0 0.0
    %297 = vmatprep.subr.mxu0 0.0
    %298 = vmatpush1.msra.mxu0 0.0
    %299 = vmatprep.subr.mxu0 0.0
    %300 = vmatpush1.msra.mxu0 0.0
    %301 = vmatprep.subr.mxu0 0.0
    %302 = vmatpush1.msra.mxu0 0.0
    %303 = vmatprep.subr.mxu0 0.0
    %304 = vmatpush1.msra.mxu0 0.0
    %305 = vmatprep.subr.mxu0 0.0
    %306 = vmatpush1.msra.mxu0 0.0
    %307 = vmatprep.subr.mxu0 0.0
    %308 = vmatpush1.msra.mxu0 0.0
    %309 = vmatprep.subr.mxu0 0.0
    %310 = vmatpush1.msra.mxu0 0.0
    %311 = vmatprep.subr.mxu0 0.0
    %312 = vmatpush1.msra.mxu0 0.0
    %313 = vmatprep.subr.mxu0 0.0
    %314 = vmatpush1.msra.mxu0 0.0
    %315 = vmatprep.subr.mxu0 0.0
    %316 = vmatpush1.msra.mxu0 0.0
    %317 = vmatprep.subr.mxu0 0.0
    %318 = vmatpush1.msra.mxu0 0.0
    %319 = vmatprep.subr.mxu0 0.0
    %320 = vmatpush1.msra.mxu0 0.0
    %321 = vmatprep.subr.mxu0 0.0
    %322 = vmatpush1.msra.mxu0 0.0
    %323 = vmatprep.subr.mxu0 0.0
    %324 = vmatpush1.msra.mxu0 0.0
    %325 = vmatprep.subr.mxu0 0.0
    %326 = vmatpush1.msra.mxu0 0.0
    %327 = vmatprep.subr.mxu0 0.0
    %328 = vmatpush1.msra.mxu0 0.0
    %329 = vmatprep.subr.mxu0 0.0
    %330 = vmatpush1.msra.mxu0 0.0
    %331 = vmatprep.subr.mxu0 0.0
    %332 = vmatpush1.msra.mxu0 0.0
    %333 = vmatprep.subr.mxu0 0.0
    %334 = vmatpush1.msra.mxu0 0.0
    %335 = vmatprep.subr.mxu0 0.0
    %336 = vmatpush1.msra.mxu0 0.0
    %337 = vmatprep.subr.mxu0 0.0
    %338 = vmatpush1.msra.mxu0 0.0
    %339 = vmatprep.subr.mxu0 0.0
    %340 = vmatpush1.msra.mxu0 0.0
    %341 = vmatprep.subr.mxu0 0.0
    %342 = vmatpush1.msra.mxu0 0.0
    %343 = vmatprep.mubr.f32.mxu0 0.0
    %344 = vmatmul.mubr.f32.gmra.mrb[0].mxu0 %v277
    %v345 = vpop.f32.mrb[0].mxu0
    %v346 = vadd.f32 %v274, %v345
    %v347 = vpop.f32.mrb[0].mxu0
    %348 = vdwg.mxu0
    %349 = vst [vmem:[#allocation3] sm:$0x1] %v346
    // Predicated region
    $region30: #{tpu_custom_call.1} parent=1 // pred_check
      _
    $region31: #{tpu_custom_call.1} parent=1 // pred_check_branch
      %351 = sbr.rel (0) target = $region33
    $region32: #{tpu_custom_call.1} parent=1 // pred_region
      %s353 = ssub.s32 16, 16
      %354 = vsyncadd [#allocation4], %s353
      %s356 = sshll.u32 [#allocation3], 4
      %s357 = int_to_ptr.vmem [resolvable:$true] %s356
      %359 = dma.vmem_to_hbm [thread:$0]  %s357, 16, %s7, [#allocation4]
    $region33: #{tpu_custom_call.1} parent=1 // pred_fallthru
      _
    // Predicated region
    $region34: #{tpu_custom_call.1} parent=1 // pred_check
      _
    $region35: #{tpu_custom_call.1} parent=1 // pred_check_branch
      %361 = sbr.rel (0) target = $region37
    $region36: #{tpu_custom_call.1} parent=1 // pred_region
      %362 = dma.done [#allocation4], 16
    $region37: #{tpu_custom_call.1} parent=1 // pred_fallthru
      _
    %363 = vsyncpa [#allocation4], 1

</llo_original>
